<compile_context>
chip_gen: v5e
topology: v5e:2x2
jax: 0.10.0
libtpu: 0.0.40
codegen_flags: <defaults>
</compile_context>

<pallas_src>
import functools

import jax
import jax.numpy as jnp
from jax import lax
from jax.experimental import pallas as pl
from jax.experimental.pallas import tpu as pltpu


# ---------------------------------------------------------------------------
# helpers
# ---------------------------------------------------------------------------

def _round_up(n, m):
    return ((n + m - 1) // m) * m


def _vmem_capacity_bytes():
    """Physical VMEM per core; conservative (v7x-sized) fallback if unknown."""
    try:
        return int(pltpu.get_tpu_info().vmem_capacity_bytes)
    except Exception:
        return 64 << 20


@functools.lru_cache(maxsize=None)
def _single_buffer_weights_supported():
    """One-time cached probe: does this build accept pipeline_mode=pl.Buffered(1)?"""
    try:
        def _k(x_ref, o_ref):
            o_ref[...] = x_ref[...]

        f = pl.pallas_call(
            _k,
            out_shape=jax.ShapeDtypeStruct((8, 128), jnp.float32),
            grid=(2,),
            in_specs=[pl.BlockSpec((8, 128), lambda i: (0, 0),
                                   pipeline_mode=pl.Buffered(1))],
            out_specs=pl.BlockSpec((8, 128), lambda i: (0, 0)),
        )
        jax.jit(f).lower(jax.ShapeDtypeStruct((8, 128), jnp.float32)).compile()
        return True
    except Exception:
        return False


# ---------------------------------------------------------------------------
# kernels
# ---------------------------------------------------------------------------

_SQRT_HALF = 0.7071067811865476


def _recon_kernel_fused(x_ref, w1_ref, b1_ref, w2_ref, b2_ref, o_ref):
    x = x_ref[...]                                                   # (tm, D)
    h = jnp.dot(x, w1_ref[...], preferred_element_type=jnp.float32)  # (tm, D4p)
    h = h + b1_ref[...].astype(jnp.float32)
    # Exact (erf) GELU — matches torch.nn.GELU(approximate='none').
    h = 0.5 * h * (1.0 + lax.erf(h * jnp.float32(_SQRT_HALF)))
    h = h.astype(w2_ref.dtype)                                       # keep bf16 MXU path
    y = jnp.dot(h, w2_ref[...], preferred_element_type=jnp.float32)  # (tm, D)
    y = y + b2_ref[...].astype(jnp.float32)
    o_ref[...] = (x.astype(jnp.float32) + y).astype(o_ref.dtype)     # residual


def _recon_kernel_d4_tiled(x_ref, w1_ref, b1_ref, w2_ref, b2_ref, o_ref, acc_ref):
    k = pl.program_id(1)

    @pl.when(k == 0)
    def _():
        acc_ref[...] = (x_ref[...].astype(jnp.float32)
                        + b2_ref[...].astype(jnp.float32))

    h = jnp.dot(x_ref[...], w1_ref[...], preferred_element_type=jnp.float32)
    h = h + b1_ref[...].astype(jnp.float32)
    h = 0.5 * h * (1.0 + lax.erf(h * jnp.float32(_SQRT_HALF)))
    h = h.astype(w2_ref.dtype)
    acc_ref[...] += jnp.dot(h, w2_ref[...], preferred_element_type=jnp.float32)

    @pl.when(k == pl.num_programs(1) - 1)
    def _():
        o_ref[...] = acc_ref[...].astype(o_ref.dtype)


# ---------------------------------------------------------------------------
# planning (pure Python, runs at trace time on static shapes)
# ---------------------------------------------------------------------------

def _plan(N, D, D4p, act_itemsize, w_itemsize, tm_req, td4_req, single_buf):
    """Returns (tm, td4, use_tiled, vmem_limit_bytes)."""
    cap = _vmem_capacity_bytes()
    budget = int(0.85 * cap)
    n_wbuf = 1 if single_buf else 2

    def fused_bytes(tm):
        w = (2 * D * D4p + D4p + D) * w_itemsize * n_wbuf
        act = 2 * 2 * tm * D * act_itemsize              # x + out tiles, double-buffered
        inter = (tm * D4p + 2 * tm * D) * 4              # h, y and f32 x live together
        return w + act + inter

    def tiled_bytes(tm, td4):
        w = (2 * D * td4 + td4 + D) * w_itemsize * 2     # streamed weight tiles, double-buffered
        act = 2 * 2 * tm * D * act_itemsize
        extra = tm * D * 4 + (tm * td4 + tm * D) * 4     # acc scratch + h tile + f32 x
        return w + act + extra

    def limit(ws):
        return int(min(max(ws + (16 << 20), 32 << 20), int(0.9 * cap)))

    # Row tile: at most the (8-rounded) row count, and small enough that the
    # row grid has >= 2 steps so dual-TensorCore chips (v7x) shard the work
    # even on small/medium batches.
    tm_hi = _round_up(max(N, 1), 8)
    tm_two = _round_up(pl.cdiv(N, 2), 8) if N > 8 else tm_hi
    tm = max(8, min(_round_up(max(tm_req, 1), 8), tm_hi, tm_two))

    use_tiled = td4_req is not None
    if not use_tiled:
        t = tm
        while t > 8 and fused_bytes(t) > budget:
            t = max(8, _round_up(t // 2, 8))
        if fused_bytes(t) <= budget:
            return t, D4p, False, limit(fused_bytes(t))
        # Resident W1+W2 (+ tiles + f32 intermediates) overflow VMEM (e.g.
        # large D on v7x's 64 MiB/TC) -> D4-tiled reduction path.
        use_tiled = True
        td4_req = D4p

    # td4 must evenly divide D4p (reduction-axis blocks may not run OOB).
    divisors = [d for d in range(128, D4p + 1, 128) if D4p % d == 0] or [D4p]
    fitting = [d for d in divisors if d <= td4_req] or [divisors[0]]
    idx = len(fitting) - 1
    while idx > 0 and tiled_bytes(tm, fitting[idx]) > budget:
        idx -= 1
    td4 = fitting[idx]
    while tm > 8 and tiled_bytes(tm, td4) > budget:
        tm = max(8, _round_up(tm // 2, 8))
    return tm, td4, True, limit(tiled_bytes(tm, td4))


# ---------------------------------------------------------------------------
# forward
# ---------------------------------------------------------------------------

@functools.partial(jax.jit, static_argnames=("tm", "td4", "single_buffer_weights"))
def _recon_forward_impl(x, w1, b1, w2, b2, *, tm, td4, single_buffer_weights):
    orig_shape = x.shape
    D = orig_shape[-1]
    D4p = w1.shape[1]

    if b1.ndim == 1:
        b1 = b1.reshape(1, -1)
    if b2.ndim == 1:
        b2 = b2.reshape(1, -1)

    x2 = x.reshape(-1, D)
    N = x2.shape[0]

    act_itemsize = jnp.dtype(x.dtype).itemsize
    w_itemsize = jnp.dtype(w1.dtype).itemsize

    tm_eff, td4_eff, use_tiled, vmem_limit = _plan(
        N, D, D4p, act_itemsize, w_itemsize, tm, td4, single_buffer_weights)

    w_kwargs = (dict(pipeline_mode=pl.Buffered(1))
                if single_buffer_weights else {})

    grid_m = pl.cdiv(N, tm_eff)

    if not use_tiled:
        out = pl.pallas_call(
            _recon_kernel_fused,
            out_shape=jax.ShapeDtypeStruct((N, D), x.dtype),
            grid_spec=pltpu.PrefetchScalarGridSpec(
                num_scalar_prefetch=0,
                grid=(grid_m,),
                in_specs=[
                    pl.BlockSpec((tm_eff, D), lambda i: (i, 0)),             # x rows
                    pl.BlockSpec((D, D4p), lambda i: (0, 0), **w_kwargs),    # W1 resident
                    pl.BlockSpec((1, D4p), lambda i: (0, 0), **w_kwargs),    # b1
                    pl.BlockSpec((D4p, D), lambda i: (0, 0), **w_kwargs),    # W2 resident
                    pl.BlockSpec((1, D), lambda i: (0, 0), **w_kwargs),      # b2
                ],
                out_specs=pl.BlockSpec((tm_eff, D), lambda i: (i, 0)),
            ),
            compiler_params=pltpu.CompilerParams(
                dimension_semantics=("parallel",),
                vmem_limit_bytes=vmem_limit,
            ),
        )(x2, w1, b1, w2, b2)
    else:
        grid_k = max(1, D4p // td4_eff)
        out = pl.pallas_call(
            _recon_kernel_d4_tiled,
            out_shape=jax.ShapeDtypeStruct((N, D), x.dtype),
            grid_spec=pltpu.PrefetchScalarGridSpec(
                num_scalar_prefetch=0,
                grid=(grid_m, grid_k),
                in_specs=[
                    pl.BlockSpec((tm_eff, D), lambda i, k: (i, 0)),          # x rows (revisited over k)
                    pl.BlockSpec((D, td4_eff), lambda i, k: (0, k)),         # W1 column tile
                    pl.BlockSpec((1, td4_eff), lambda i, k: (0, k)),         # b1 tile
                    pl.BlockSpec((td4_eff, D), lambda i, k: (k, 0)),         # W2 row tile
                    pl.BlockSpec((1, D), lambda i, k: (0, 0), **w_kwargs),   # b2
                ],
                out_specs=pl.BlockSpec((tm_eff, D), lambda i, k: (i, 0)),
                scratch_shapes=[pltpu.VMEM((tm_eff, D), jnp.float32)],
            ),
            compiler_params=pltpu.CompilerParams(
                dimension_semantics=("parallel", "arbitrary"),
                vmem_limit_bytes=vmem_limit,
            ),
        )(x2, w1, b1, w2, b2)

    return out.reshape(orig_shape)


def recon_forward(x, w1, b1, w2, b2, *, tm=512, td4=None):
    """x: (..., hidden); params ideally lane-padded once via prepare_recon_params.

    Returns x + Linear2(GELU(Linear1(x))).  Asynchronous — callers/tests should
    block on the result themselves.  `td4` forces the D4-tiled reduction path.
    """
    single = _single_buffer_weights_supported()
    return _recon_forward_impl(x, w1, b1, w2, b2, tm=tm, td4=td4,
                               single_buffer_weights=single)


# ---------------------------------------------------------------------------
# params
# ---------------------------------------------------------------------------

def init_recon_params(key, hidden_dim, dtype=jnp.float32):
    """Deterministic init mirroring nn.Linear default U(-1/sqrt(fan_in), ...).
    Weights are stored transposed relative to torch (in_features, out_features)
    so the kernel computes x @ W directly."""
    d4 = hidden_dim // 4
    k1, k2, k3, k4 = jax.random.split(key, 4)
    bound1 = 1.0 / (hidden_dim ** 0.5)
    bound2 = 1.0 / (d4 ** 0.5)
    w1 = jax.random.uniform(k1, (hidden_dim, d4), dtype, -bound1, bound1)
    b1 = jax.random.uniform(k2, (d4,), dtype, -bound1, bound1)
    w2 = jax.random.uniform(k3, (d4, hidden_dim), dtype, -bound2, bound2)
    b2 = jax.random.uniform(k4, (hidden_dim,), dtype, -bound2, bound2)
    return w1, b1, w2, b2


def prepare_recon_params(w1, b1, w2, b2, *, lane_multiple=256):
    """Pad the MLP inner dim (D4) to a lane multiple ONCE, outside the per-call
    path (256 matches the 256-wide MXUs of v6e/v7x; 128 is enough on v5e).
    Zero padding is exact: GELU(0)=0 and the padded W2 rows are zero."""
    D, D4 = w1.shape
    D4p = _round_up(D4, lane_multiple)
    pad = D4p - D4
    if pad:
        w1 = jnp.pad(w1, ((0, 0), (0, pad)))
        b1 = jnp.pad(b1, ((0, pad),))
        w2 = jnp.pad(w2, ((0, pad), (0, 0)))
    return w1, b1.reshape(1, D4p), w2, b2.reshape(1, D)


def recon_reference(x, w1, b1, w2, b2):
    h = x.astype(jnp.float32) @ w1.astype(jnp.float32) + b1.astype(jnp.float32)
    h = 0.5 * h * (1.0 + lax.erf(h * jnp.float32(_SQRT_HALF)))
    y = h @ w2.astype(jnp.float32) + b2.astype(jnp.float32)
    return (x + y).astype(x.dtype)


# ---------------------------------------------------------------------------
# test
# ---------------------------------------------------------------------------

if __name__ == "__main__":
    key = jax.random.PRNGKey(0)
    k_x, k_p = jax.random.split(key)

    batch, seq, hidden = 2, 8, 32
    x = jax.random.normal(k_x, (batch, seq, hidden), jnp.float32)
    w1, b1, w2, b2 = init_recon_params(k_p, hidden)
    pw1, pb1, pw2, pb2 = prepare_recon_params(w1, b1, w2, b2)

    ref = recon_reference(x, w1, b1, w2, b2)

    # Fused (resident-weights) path — the default.
    out = jax.block_until_ready(recon_forward(x, pw1, pb1, pw2, pb2))
    assert out.shape == x.shape and out.dtype == x.dtype
    assert jnp.allclose(out, ref, atol=1e-5, rtol=1e-5), "fused path mismatch"

    # D4-tiled reduction path (the large-D / v7x structure), forced small here
    # so it is compiled and correctness-checked as well.
    out_t = jax.block_until_ready(recon_forward(x, pw1, pb1, pw2, pb2, td4=128))
    assert jnp.allclose(out_t, ref, atol=1e-5, rtol=1e-5), "tiled path mismatch"

    print("KERNEL_OK")
</pallas_src>

<mosaic_0001>
module attributes {stable_mosaic.version = 11 : i64} {
  func.func @_recon_kernel_fused(%arg0: i32, %arg1: memref<8x32xf32, #tpu.memory_space<vmem>>, %arg2: memref<32x256xf32, #tpu.memory_space<vmem>>, %arg3: memref<1x256xf32, #tpu.memory_space<vmem>>, %arg4: memref<256x32xf32, #tpu.memory_space<vmem>>, %arg5: memref<1x32xf32, #tpu.memory_space<vmem>>, %arg6: memref<8x32xf32, #tpu.memory_space<vmem>>) attributes {dimension_semantics = [#tpu.dimension_semantics<parallel>], iteration_bounds = array<i64: 2>, scalar_prefetch = 0 : i64, scratch_operands = 0 : i64, tpu.core_type = #tpu.core_type<tc>, window_params = [{transform_indices = @transform_0, window_bounds = array<i64: 8, 32>}, {pipeline_mode = #tpu.pipeline_mode<synchronous>, transform_indices = @transform_1, window_bounds = array<i64: 32, 256>}, {pipeline_mode = #tpu.pipeline_mode<synchronous>, transform_indices = @transform_2, window_bounds = array<i64: 1, 256>}, {pipeline_mode = #tpu.pipeline_mode<synchronous>, transform_indices = @transform_3, window_bounds = array<i64: 256, 32>}, {pipeline_mode = #tpu.pipeline_mode<synchronous>, transform_indices = @transform_4, window_bounds = array<i64: 1, 32>}, {transform_indices = @transform_5, window_bounds = array<i64: 8, 32>}]} {
    %c0 = arith.constant 0 : index
    %c0_0 = arith.constant 0 : index
    %0 = vector.load %arg1[%c0, %c0_0] : memref<8x32xf32, #tpu.memory_space<vmem>>, vector<8x32xf32>
    %c0_1 = arith.constant 0 : index
    %c0_2 = arith.constant 0 : index
    %1 = vector.load %arg2[%c0_1, %c0_2] : memref<32x256xf32, #tpu.memory_space<vmem>>, vector<32x256xf32>
    %cst = arith.constant dense<0.000000e+00> : vector<8x256xf32>
    %2 = tpu.matmul %0, %1, %cst {dimension_numbers = #tpu.dot_dimension_numbers<[1], [0], [0], [1], [0, 0, 1, 1], [], []>} : vector<8x32xf32>, vector<32x256xf32>, vector<8x256xf32> -> vector<8x256xf32>
    %c0_3 = arith.constant 0 : index
    %c0_4 = arith.constant 0 : index
    %3 = vector.load %arg3[%c0_3, %c0_4] : memref<1x256xf32, #tpu.memory_space<vmem>>, vector<1x256xf32>
    %4 = vector.broadcast %3 : vector<1x256xf32> to vector<8x256xf32>
    %5 = arith.addf %2, %4 : vector<8x256xf32>
    %cst_5 = arith.constant 5.000000e-01 : f32
    %6 = vector.broadcast %cst_5 : f32 to vector<8x256xf32>
    %7 = arith.mulf %6, %5 : vector<8x256xf32>
    %cst_6 = arith.constant 0.707106769 : f32
    %8 = vector.broadcast %cst_6 : f32 to vector<8x256xf32>
    %9 = arith.mulf %5, %8 : vector<8x256xf32>
    %10 = math.erf %9 : vector<8x256xf32>
    %cst_7 = arith.constant 1.000000e+00 : f32
    %11 = vector.broadcast %cst_7 : f32 to vector<8x256xf32>
    %12 = arith.addf %11, %10 : vector<8x256xf32>
    %13 = arith.mulf %7, %12 : vector<8x256xf32>
    %c0_8 = arith.constant 0 : index
    %c0_9 = arith.constant 0 : index
    %14 = vector.load %arg4[%c0_8, %c0_9] : memref<256x32xf32, #tpu.memory_space<vmem>>, vector<256x32xf32>
    %cst_10 = arith.constant dense<0.000000e+00> : vector<8x32xf32>
    %15 = tpu.matmul %13, %14, %cst_10 {dimension_numbers = #tpu.dot_dimension_numbers<[1], [0], [0], [1], [0, 0, 1, 1], [], []>} : vector<8x256xf32>, vector<256x32xf32>, vector<8x32xf32> -> vector<8x32xf32>
    %c0_11 = arith.constant 0 : index
    %c0_12 = arith.constant 0 : index
    %16 = vector.load %arg5[%c0_11, %c0_12] : memref<1x32xf32, #tpu.memory_space<vmem>>, vector<1x32xf32>
    %17 = vector.broadcast %16 : vector<1x32xf32> to vector<8x32xf32>
    %18 = arith.addf %15, %17 : vector<8x32xf32>
    %19 = arith.addf %0, %18 : vector<8x32xf32>
    %c0_13 = arith.constant 0 : index
    %c0_14 = arith.constant 0 : index
    %20 = vector.load %arg6[%c0_13, %c0_14] : memref<8x32xf32, #tpu.memory_space<vmem>>, vector<8x32xf32>
    tpu.vector_store %arg6[%c0_13, %c0_14], %19 {strides = array<i32>} : memref<8x32xf32, #tpu.memory_space<vmem>>, vector<8x32xf32>,
    return
  }
  func.func @transform_0(%arg0: i32) -> (i32, i32) {
    %c0_i32 = arith.constant 0 : i32
    %c0_i32_0 = arith.constant 0 : i32
    return %arg0, %c0_i32 : i32, i32
  }
  func.func @transform_1(%arg0: i32) -> (i32, i32) {
    %c0_i32 = arith.constant 0 : i32
    %c0_i32_0 = arith.constant 0 : i32
    %c0_i32_1 = arith.constant 0 : i32
    return %c0_i32, %c0_i32_0 : i32, i32
  }
  func.func @transform_2(%arg0: i32) -> (i32, i32) {
    %c0_i32 = arith.constant 0 : i32
    %c0_i32_0 = arith.constant 0 : i32
    %c0_i32_1 = arith.constant 0 : i32
    return %c0_i32, %c0_i32_0 : i32, i32
  }
  func.func @transform_3(%arg0: i32) -> (i32, i32) {
    %c0_i32 = arith.constant 0 : i32
    %c0_i32_0 = arith.constant 0 : i32
    %c0_i32_1 = arith.constant 0 : i32
    return %c0_i32, %c0_i32_0 : i32, i32
  }
  func.func @transform_4(%arg0: i32) -> (i32, i32) {
    %c0_i32 = arith.constant 0 : i32
    %c0_i32_0 = arith.constant 0 : i32
    %c0_i32_1 = arith.constant 0 : i32
    return %c0_i32, %c0_i32_0 : i32, i32
  }
  func.func @transform_5(%arg0: i32) -> (i32, i32) {
    %c0_i32 = arith.constant 0 : i32
    %c0_i32_0 = arith.constant 0 : i32
    return %arg0, %c0_i32 : i32, i32
  }
}

</mosaic_0001>

<llo_original>
// kernel: _recon_forward_impl.1
$region0: #{_recon_forward_impl.1}
  #allocation0 [shape = 'u32[]', space=smem, size = 0x4, offset = 0x4, fixed_abs, tag = 'smem constant byte address 0x4 - core index']
  #allocation1 [shape = 'u32[72,128]{1,0:T(1,128)}', space=vmem, size = 0x9000, scoped, tag = 'internal scratch']
  %s0 = inlined_call_operand.vmem [shape: f32[16,32], index: 0, kind: input, shape index: {}]
  %s1 = inlined_call_operand.vmem [shape: f32[32,256], index: 1, kind: input, shape index: {}]
  %s2 = inlined_call_operand.vmem [shape: f32[1,256], index: 2, kind: input, shape index: {}]
  %s3 = inlined_call_operand.vmem [shape: f32[256,32], index: 3, kind: input, shape index: {}]
  %s4 = inlined_call_operand.vmem [shape: f32[1,32], index: 4, kind: input, shape index: {}]
  %s5 = inlined_call_operand.hbm [shape: f32[16,32], index: 5, kind: output, shape index: {}]
  %s6 = sld [smem:[#allocation0]]
  $region53: #{_recon_forward_impl.1} parent=0
    _
  %s8 = ssub.s32 1, %s6
  %s9 = scalar_select 0, %s8, %s6
  $region1: #{_recon_forward_impl.1} parent=0
    #allocation2 [shape = 'u8[8192]{0}', space=vmem, size = 0x2000, scoped, tag = 'output window, operand 0']
    #allocation3 [shape = 's32[2]{0}', space=sflag, size = 0x8, scoped, tag = 'scoped memory for _recon_forward_impl.1']
    %10 = vsyncpa [#allocation3], 0
    %s11 = scalar_lea.sflag [#allocation3], 1
    %12 = vsyncpa %s11, 0
    loop: start=0, step=1, limit=4
    $region2: #{_recon_forward_impl.1} parent=1 // loop_pre_header
      _
    $region3: #{_recon_forward_impl.1} parent=1 // loop_header
      %s14 = sphi 0, %s18
      %p15 = scmp.ge.s32.totalorder %s14, 4
      %s24 = sphi 0, %s26
      %s27 = sphi 0, %s24
      %s28 = sphi 0, %s27
      %s44 = sphi 0, %s28
      %s48 = sphi 0, %s48
      %s50 = sphi 0, %s48
      %s51 = sphi 0, %s50
      %s65 = sphi 0, %s51
      %s69 = sphi 0, %s69
      %s71 = sphi 0, %s69
      %s72 = sphi 0, %s71
      %s86 = sphi 0, %s72
      %s90 = sphi 0, %s90
      %s92 = sphi 0, %s90
      %s93 = sphi 0, %s92
      %s107 = sphi 0, %s93
      %s111 = sphi 0, %s111
      %s113 = sphi 0, %s111
      %s114 = sphi 0, %s113
      %s128 = sphi 0, %s114
      %s134 = sphi 0, %s136
      %s137 = sphi 0, %s134
      %s138 = sphi 0, %s137
      %s154 = sphi 0, %s138
    $region4: #{_recon_forward_impl.1} parent=1 // loop_header_branch
      %17 = sbr.rel (%p15) target = $region8
    $region5: #{_recon_forward_impl.1} parent=1 // loop_body
      %s19 = ssub.s32 %s14, 1
      %s20 = ssub.s32 %s14, 2
      %s21 = sadd.s32 %s14, 1
      %s22 = ssub.s32 %s14, %s21
      %p23 = scmp.eq.s32.totalorder %s22, 0
      %s25 = sadd.s32 %s24, 1
      %s26 = scalar_select %p23, %s24, %s25
      %p29 = pneg %p23
      %p30 = scmp.eq.s32.totalorder %s14, 1
      %p31 = por %p29, %p30
      %p32 = scmp.ne.s32.totalorder %s24, %s27
      %p33 = scmp.eq.s32.totalorder %s14, 0
      %p34 = por %p32, %p33
      %p35 = scmp.ne.s32.totalorder %s24, %s27
      %p36 = scmp.eq.s32.totalorder %s19, 1
      %p37 = por %p35, %p36
      %p38 = scmp.ne.s32.totalorder %s27, %s28
      %p39 = scmp.eq.s32.totalorder %s19, 0
      %p40 = por %p38, %p39
      %p41 = scmp.ne.s32.totalorder %s27, %s28
      %p42 = scmp.eq.s32.totalorder %s20, 1
      %p43 = por %p41, %p42
      %p45 = scmp.ne.s32.totalorder %s28, %s44
      %p46 = scmp.eq.s32.totalorder %s20, 0
      %p47 = por %p45, %p46
      %s49 = sadd.s32 %s48, 1
      %p52 = scmp.eq.s32.totalorder %s14, 1
      %p53 = scmp.ne.s32.totalorder %s48, %s50
      %p54 = scmp.eq.s32.totalorder %s14, 0
      %p55 = por %p53, %p54
      %p56 = scmp.ne.s32.totalorder %s48, %s50
      %p57 = scmp.eq.s32.totalorder %s19, 1
      %p58 = por %p56, %p57
      %p59 = scmp.ne.s32.totalorder %s50, %s51
      %p60 = scmp.eq.s32.totalorder %s19, 0
      %p61 = por %p59, %p60
      %p62 = scmp.ne.s32.totalorder %s50, %s51
      %p63 = scmp.eq.s32.totalorder %s20, 1
      %p64 = por %p62, %p63
      %p66 = scmp.ne.s32.totalorder %s51, %s65
      %p67 = scmp.eq.s32.totalorder %s20, 0
      %p68 = por %p66, %p67
      %s70 = sadd.s32 %s69, 1
      %p73 = scmp.eq.s32.totalorder %s14, 1
      %p74 = scmp.ne.s32.totalorder %s69, %s71
      %p75 = scmp.eq.s32.totalorder %s14, 0
      %p76 = por %p74, %p75
      %p77 = scmp.ne.s32.totalorder %s69, %s71
      %p78 = scmp.eq.s32.totalorder %s19, 1
      %p79 = por %p77, %p78
      %p80 = scmp.ne.s32.totalorder %s71, %s72
      %p81 = scmp.eq.s32.totalorder %s19, 0
      %p82 = por %p80, %p81
      %p83 = scmp.ne.s32.totalorder %s71, %s72
      %p84 = scmp.eq.s32.totalorder %s20, 1
      %p85 = por %p83, %p84
      %p87 = scmp.ne.s32.totalorder %s72, %s86
      %p88 = scmp.eq.s32.totalorder %s20, 0
      %p89 = por %p87, %p88
      %s91 = sadd.s32 %s90, 1
      %p94 = scmp.eq.s32.totalorder %s14, 1
      %p95 = scmp.ne.s32.totalorder %s90, %s92
      %p96 = scmp.eq.s32.totalorder %s14, 0
      %p97 = por %p95, %p96
      %p98 = scmp.ne.s32.totalorder %s90, %s92
      %p99 = scmp.eq.s32.totalorder %s19, 1
      %p100 = por %p98, %p99
      %p101 = scmp.ne.s32.totalorder %s92, %s93
      %p102 = scmp.eq.s32.totalorder %s19, 0
      %p103 = por %p101, %p102
      %p104 = scmp.ne.s32.totalorder %s92, %s93
      %p105 = scmp.eq.s32.totalorder %s20, 1
      %p106 = por %p104, %p105
      %p108 = scmp.ne.s32.totalorder %s93, %s107
      %p109 = scmp.eq.s32.totalorder %s20, 0
      %p110 = por %p108, %p109
      %s112 = sadd.s32 %s111, 1
      %p115 = scmp.eq.s32.totalorder %s14, 1
      %p116 = scmp.ne.s32.totalorder %s111, %s113
      %p117 = scmp.eq.s32.totalorder %s14, 0
      %p118 = por %p116, %p117
      %p119 = scmp.ne.s32.totalorder %s111, %s113
      %p120 = scmp.eq.s32.totalorder %s19, 1
      %p121 = por %p119, %p120
      %p122 = scmp.ne.s32.totalorder %s113, %s114
      %p123 = scmp.eq.s32.totalorder %s19, 0
      %p124 = por %p122, %p123
      %p125 = scmp.ne.s32.totalorder %s113, %s114
      %p126 = scmp.eq.s32.totalorder %s20, 1
      %p127 = por %p125, %p126
      %p129 = scmp.ne.s32.totalorder %s114, %s128
      %p130 = scmp.eq.s32.totalorder %s20, 0
      %p131 = por %p129, %p130
      %s132 = ssub.s32 %s14, %s21
      %p133 = scmp.eq.s32.totalorder %s132, 0
      %s135 = sadd.s32 %s134, 1
      %s136 = scalar_select %p133, %s134, %s135
      %p139 = pneg %p133
      %p140 = scmp.eq.s32.totalorder %s14, 1
      %p141 = por %p139, %p140
      %p142 = scmp.ne.s32.totalorder %s134, %s137
      %p143 = scmp.eq.s32.totalorder %s14, 0
      %p144 = por %p142, %p143
      %p145 = scmp.ne.s32.totalorder %s134, %s137
      %p146 = scmp.eq.s32.totalorder %s19, 1
      %p147 = por %p145, %p146
      %p148 = scmp.ne.s32.totalorder %s137, %s138
      %p149 = scmp.eq.s32.totalorder %s19, 0
      %p150 = por %p148, %p149
      %p151 = scmp.ne.s32.totalorder %s137, %s138
      %p152 = scmp.eq.s32.totalorder %s20, 1
      %p153 = por %p151, %p152
      %p155 = scmp.ne.s32.totalorder %s138, %s154
      %p156 = scmp.eq.s32.totalorder %s20, 0
      %p157 = por %p155, %p156
      %p158 = scmp.le.s32.totalorder 1, %s14
      %p159 = scmp.lt.s32.totalorder %s14, 3
      %p160 = pnand %p158, %p159
      %p161 = pneg %p160
      // Predicated region
      $region9: #{_recon_forward_impl.1} parent=5 // pred_check
        _
      $region10: #{_recon_forward_impl.1} parent=5 // pred_check_branch
        %163 = sbr.rel (%p160) target = $region12
      $region11: #{_recon_forward_impl.1} parent=5 // pred_region
        %s164 = ssub.s32 %s14, 1
        // Predicated region
        $region13: #{_recon_forward_impl.1} parent=11 // pred_check
          %p165 = pneg %p61
        $region14: #{_recon_forward_impl.1} parent=11 // pred_check_branch
          %167 = sbr.rel (%p165) target = $region16
        $region15: #{_recon_forward_impl.1} parent=11 // pred_region
          _
        $region16: #{_recon_forward_impl.1} parent=11 // pred_fallthru
          _
        // Predicated region
        $region17: #{_recon_forward_impl.1} parent=11 // pred_check
          %p168 = pneg %p82
        $region18: #{_recon_forward_impl.1} parent=11 // pred_check_branch
          %170 = sbr.rel (%p168) target = $region20
        $region19: #{_recon_forward_impl.1} parent=11 // pred_region
          _
        $region20: #{_recon_forward_impl.1} parent=11 // pred_fallthru
          _
        // Predicated region
        $region21: #{_recon_forward_impl.1} parent=11 // pred_check
          %p171 = pneg %p103
        $region22: #{_recon_forward_impl.1} parent=11 // pred_check_branch
          %173 = sbr.rel (%p171) target = $region24
        $region23: #{_recon_forward_impl.1} parent=11 // pred_region
          _
        $region24: #{_recon_forward_impl.1} parent=11 // pred_fallthru
          _
        // Predicated region
        $region25: #{_recon_forward_impl.1} parent=11 // pred_check
          %p174 = pneg %p124
        $region26: #{_recon_forward_impl.1} parent=11 // pred_check_branch
          %176 = sbr.rel (%p174) target = $region28
        $region27: #{_recon_forward_impl.1} parent=11 // pred_region
          _
        $region28: #{_recon_forward_impl.1} parent=11 // pred_fallthru
          _
      $region12: #{_recon_forward_impl.1} parent=5 // pred_fallthru
        _
      %p177 = scmp.lt.s32.totalorder %s14, 2
      // Predicated region
      $region29: #{_recon_forward_impl.1} parent=5 // pred_check
        %p178 = pneg %p177
      $region30: #{_recon_forward_impl.1} parent=5 // pred_check_branch
        %180 = sbr.rel (%p178) target = $region32
      $region31: #{_recon_forward_impl.1} parent=5 // pred_region
        // Predicated region
        $region33: #{_recon_forward_impl.1} parent=31 // pred_check
          %p181 = pneg %p34
        $region34: #{_recon_forward_impl.1} parent=31 // pred_check_branch
          %183 = sbr.rel (%p181) target = $region36
        $region35: #{_recon_forward_impl.1} parent=31 // pred_region
          %p184 = scmp.lt.s32.totalorder %s14, 1
          %s185 = scalar_select %p184, %s14, 1
          %s186 = smul.addr %s185, 8
          %s187 = scalar_lea.vmem %s0, %s186
        $region36: #{_recon_forward_impl.1} parent=31 // pred_fallthru
          _
      $region32: #{_recon_forward_impl.1} parent=5 // pred_fallthru
        _
      %p188 = scmp.le.s32.totalorder 1, %s14
      %p189 = scmp.lt.s32.totalorder %s14, 3
      %p190 = pnand %p188, %p189
      %p191 = pneg %p190
      // Predicated region
      $region37: #{_recon_forward_impl.1} parent=5 // pred_check
        _
      $region38: #{_recon_forward_impl.1} parent=5 // pred_check_branch
        %193 = sbr.rel (%p190) target = $region40
      $region39: #{_recon_forward_impl.1} parent=5 // pred_region
        %s194 = ssub.s32 %s14, 1
        %p195 = scmp.lt.s32.totalorder %s19, 1
        %s196 = scalar_select %p195, %s19, 1
        %s197 = smul.addr %s196, 8
        %s198 = scalar_lea.vmem %s0, %s197
        %p199 = pneg %p40
        %p200 = pneg %p37
        %p201 = pneg %p61
        %p202 = pneg %p58
        %p203 = pneg %p82
        %p204 = pneg %p79
        %p205 = pneg %p103
        %p206 = pneg %p100
        %p207 = pneg %p124
        %p208 = pneg %p121
        %p209 = pneg %p150
        %p210 = pneg %p147
        %s211 = sand.u32 %s137, 1
        %s212 = scalar_lea.sflag [#allocation3], %s211
        %s213 = sand.u32 %s137, 1
        %s214 = smul.addr %s213, 8
        %s215 = scalar_lea.vmem [#allocation2], %s214
        %p216 = scmp.lt.s32.totalorder %s19, 1
        %s217 = scalar_select %p216, %s19, 1
        %s218 = smul.addr %s217, 8
        %s219 = scalar_lea.vmem %s0, %s218
        %v220 = vld [vmem:[%s219] sm:$0xff]
        %v221 = vld [vmem:[%s1] sm:$0xff]
        %v222 = vld [vmem:[%s1 + $0x8] sm:$0xff]
        %v223 = vld [vmem:[%s1 + $0x10] sm:$0xff]
        %v224 = vld [vmem:[%s1 + $0x18] sm:$0xff]
        %v225 = vld [vmem:[%s1 + $0x20] sm:$0xff]
        %v226 = vld [vmem:[%s1 + $0x28] sm:$0xff]
        %v227 = vld [vmem:[%s1 + $0x30] sm:$0xff]
        %v228 = vld [vmem:[%s1 + $0x38] sm:$0xff]
        %v229 = vld [vmem:[%s2] sm:$0x3]
        %v231 = vperm.slane %v229, 0
        %v232 = vperm.slane %v229, 1
        %vm235 = vcmask 261120
        %v237 = vsel %vm235, %v220, 0
        %239 = vmatpush.msra.mxu0 0.0
        %240 = vmatpush.msra.mxu0 0.0
        %241 = vmatpush.msra.mxu0 0.0
        %242 = vmatpush.msra.mxu0 0.0
        %243 = vmatpush.msra.mxu0 0.0
        %244 = vmatpush.msra.mxu0 0.0
        %245 = vmatpush.msra.mxu0 0.0
        %246 = vmatpush.msra.mxu0 0.0
        %247 = vmatpush.msra.mxu0 0.0
        %248 = vmatpush.msra.mxu0 0.0
        %249 = vmatpush.msra.mxu0 0.0
        %250 = vmatpush.msra.mxu0 0.0
        %251 = vmatpush.msra.mxu0 %v227
        %252 = vmatpush.msra.mxu0 %v225
        %253 = vmatpush.msra.mxu0 %v223
        %254 = vmatpush.msra.mxu0 %v221
        %255 = vmatmul.f32.gmra.mxu0 %v237
        %v256 = vpop.f32.mrf.mxu0
        %v257 = vadd.f32 %v231, %v256
        %258 = vdwg.mxu0
        %259 = vmatpush.msra.mxu0 0.0
        %260 = vmatpush.msra.mxu0 0.0
        %261 = vmatpush.msra.mxu0 0.0
        %262 = vmatpush.msra.mxu0 0.0
        %263 = vmatpush.msra.mxu0 0.0
        %264 = vmatpush.msra.mxu0 0.0
        %265 = vmatpush.msra.mxu0 0.0
        %266 = vmatpush.msra.mxu0 0.0
        %267 = vmatpush.msra.mxu0 0.0
        %268 = vmatpush.msra.mxu0 0.0
        %269 = vmatpush.msra.mxu0 0.0
        %270 = vmatpush.msra.mxu0 0.0
        %271 = vmatpush.msra.mxu0 %v228
        %272 = vmatpush.msra.mxu0 %v226
        %273 = vmatpush.msra.mxu0 %v224
        %274 = vmatpush.msra.mxu0 %v222
        %275 = vmatmul.f32.gmra.mxu0 %v237
        %v276 = vpop.f32.mrf.mxu0
        %v277 = vadd.f32 %v232, %v276
        %278 = vdwg.mxu0
        %v279 = vmul.f32 %v257, 0.5
        %v280 = vmul.f32 %v277, 0.5
        %v281 = vmul.f32 %v257, 0.70710677
        %v282 = vmul.f32 %v277, 0.70710677
        %v283 = vmul.f32 %v281, %v281
        %v284 = vmin.f32 16.0, %v283
        %v285 = vmul.f32 %v284, 2.1237322e-06
        %v286 = vadd.f32 %v285, 0.00028619796
        %v287 = vmul.f32 %v284, %v286
        %v288 = vadd.f32 %v287, 0.0036580483
        %v289 = vmul.f32 %v284, %v288
        %v290 = vadd.f32 %v289, 0.05243302
        %v291 = vmul.f32 %v284, %v290
        %v292 = vadd.f32 %v291, 0.18741608
        %v293 = vmul.f32 %v284, %v292
        %v294 = vadd.f32 %v293, 1.1283791
        %v295 = vmul.f32 %v281, %v294
        %v296 = vmul.f32 %v284, 3.8918573e-05
        %v297 = vadd.f32 %v296, 0.001143296
        %v298 = vmul.f32 %v284, %v297
        %v299 = vadd.f32 %v298, 0.014752088
        %v300 = vmul.f32 %v284, %v299
        %v301 = vadd.f32 %v300, 0.112945676
        %v302 = vmul.f32 %v284, %v301
        %v303 = vadd.f32 %v302, 0.4994258
        %v304 = vmul.f32 %v284, %v303
        %v305 = vadd.f32 %v304, 1.0
        %v306 = vrcp.pop %v305
        %v307 = vmul.f32 %v305, %v306
        %v308 = vsub.f32 1.0, %v307
        %v309 = vmul.f32 %v306, %v308
        %v310 = vadd.f32 %v306, %v309
        %vm311 = vweird.f32 %v305
        %vm312 = vweird.f32 %v306
        %vm313 = vmor %vm311, %vm312
        %v314 = vsel %vm313, %v306, %v310
        %v315 = vand.u32 2147483647, %v305
        %vm316 = vcmp.eq.f32.partialorder %v315, 8.507059e+37
        %v317 = vand.u32 %v305, 2147483648
        %v318 = vor.u32 1.1754944e-38, %v317
        %v319 = vsel %vm316, %v318, %v314
        %v320 = vmul.f32 %v295, %v319
        %v321 = vmin.f32 %v320, 1.0
        %v322 = vmax.f32 %v321, -1.0
        %v323 = vmul.f32 %v282, %v282
        %v324 = vmin.f32 16.0, %v323
        %v325 = vmul.f32 %v324, 2.1237322e-06
        %v326 = vadd.f32 %v325, 0.00028619796
        %v327 = vmul.f32 %v324, %v326
        %v328 = vadd.f32 %v327, 0.0036580483
        %v329 = vmul.f32 %v324, %v328
        %v330 = vadd.f32 %v329, 0.05243302
        %v331 = vmul.f32 %v324, %v330
        %v332 = vadd.f32 %v331, 0.18741608
        %v333 = vmul.f32 %v324, %v332
        %v334 = vadd.f32 %v333, 1.1283791
        %v335 = vmul.f32 %v282, %v334
        %v336 = vmul.f32 %v324, 3.8918573e-05
        %v337 = vadd.f32 %v336, 0.001143296
        %v338 = vmul.f32 %v324, %v337
        %v339 = vadd.f32 %v338, 0.014752088
        %v340 = vmul.f32 %v324, %v339
        %v341 = vadd.f32 %v340, 0.112945676
        %v342 = vmul.f32 %v324, %v341
        %v343 = vadd.f32 %v342, 0.4994258
        %v344 = vmul.f32 %v324, %v343
        %v345 = vadd.f32 %v344, 1.0
        %v346 = vrcp.pop %v345
        %v347 = vmul.f32 %v345, %v346
        %v348 = vsub.f32 1.0, %v347
        %v349 = vmul.f32 %v346, %v348
        %v350 = vadd.f32 %v346, %v349
        %vm351 = vweird.f32 %v345
        %vm352 = vweird.f32 %v346
        %vm353 = vmor %vm351, %vm352
        %v354 = vsel %vm353, %v346, %v350
        %v355 = vand.u32 2147483647, %v345
        %vm356 = vcmp.eq.f32.partialorder %v355, 8.507059e+37
        %v357 = vand.u32 %v345, 2147483648
        %v358 = vor.u32 1.1754944e-38, %v357
        %v359 = vsel %vm356, %v358, %v354
        %v360 = vmul.f32 %v335, %v359
        %v361 = vmin.f32 %v360, 1.0
        %v362 = vmax.f32 %v361, -1.0
        %v363 = vadd.f32 %v322, 1.0
        %v364 = vadd.f32 %v362, 1.0
        %v365 = vmul.f32 %v279, %v363
        %v366 = vmul.f32 %v280, %v364
        %v367 = vld [vmem:[%s3] sm:$0xff]
        %v368 = vld [vmem:[%s3 + $0x8] sm:$0xff]
        %v369 = vld [vmem:[%s3 + $0x10] sm:$0xff]
        %v370 = vld [vmem:[%s3 + $0x18] sm:$0xff]
        %v371 = vld [vmem:[%s3 + $0x20] sm:$0xff]
        %v372 = vld [vmem:[%s3 + $0x28] sm:$0xff]
        %v373 = vld [vmem:[%s3 + $0x30] sm:$0xff]
        %v374 = vld [vmem:[%s3 + $0x38] sm:$0xff]
        %v375 = vld [vmem:[%s3 + $0x40] sm:$0xff]
        %v376 = vld [vmem:[%s3 + $0x48] sm:$0xff]
        %v377 = vld [vmem:[%s3 + $0x50] sm:$0xff]
        %v378 = vld [vmem:[%s3 + $0x58] sm:$0xff]
        %v379 = vld [vmem:[%s3 + $0x60] sm:$0xff]
        %v380 = vld [vmem:[%s3 + $0x68] sm:$0xff]
        %v381 = vld [vmem:[%s3 + $0x70] sm:$0xff]
        %v382 = vld [vmem:[%s3 + $0x78] sm:$0xff]
        %v383 = vld [vmem:[%s3 + $0x80] sm:$0xff]
        %v384 = vld [vmem:[%s3 + $0x88] sm:$0xff]
        %v385 = vld [vmem:[%s3 + $0x90] sm:$0xff]
        %v386 = vld [vmem:[%s3 + $0x98] sm:$0xff]
        %v387 = vld [vmem:[%s3 + $0xa0] sm:$0xff]
        %v388 = vld [vmem:[%s3 + $0xa8] sm:$0xff]
        %v389 = vld [vmem:[%s3 + $0xb0] sm:$0xff]
        %v390 = vld [vmem:[%s3 + $0xb8] sm:$0xff]
        %v391 = vld [vmem:[%s3 + $0xc0] sm:$0xff]
        %v392 = vld [vmem:[%s3 + $0xc8] sm:$0xff]
        %v393 = vld [vmem:[%s3 + $0xd0] sm:$0xff]
        %v394 = vld [vmem:[%s3 + $0xd8] sm:$0xff]
        %v395 = vld [vmem:[%s3 + $0xe0] sm:$0xff]
        %v396 = vld [vmem:[%s3 + $0xe8] sm:$0xff]
        %v397 = vld [vmem:[%s3 + $0xf0] sm:$0xff]
        %v398 = vld [vmem:[%s3 + $0xf8] sm:$0xff]
        %v399 = vld [vmem:[%s4] sm:$0x1]
        %v401 = vperm.slane %v399, 0
        %403 = vmatpush.msra.mxu0 %v382
        %404 = vmatpush.msra.mxu0 %v381
        %405 = vmatpush.msra.mxu0 %v380
        %406 = vmatpush.msra.mxu0 %v379
        %407 = vmatpush.msra.mxu0 %v378
        %408 = vmatpush.msra.mxu0 %v377
        %409 = vmatpush.msra.mxu0 %v376
        %410 = vmatpush.msra.mxu0 %v375
        %411 = vmatpush.msra.mxu0 %v374
        %412 = vmatpush.msra.mxu0 %v373
        %413 = vmatpush.msra.mxu0 %v372
        %414 = vmatpush.msra.mxu0 %v371
        %415 = vmatpush.msra.mxu0 %v370
        %416 = vmatpush.msra.mxu0 %v369
        %417 = vmatpush.msra.mxu0 %v368
        %418 = vmatpush.msra.mxu0 %v367
        %419 = vmatmul.f32.gmra.mxu0 %v365
        %v420 = vpop.f32.mrf.mxu0
        %v421 = vadd.f32 %v401, %v420
        %422 = vdwg.mxu0
        %423 = vmatpush.msra.mxu0 %v398
        %424 = vmatpush.msra.mxu0 %v397
        %425 = vmatpush.msra.mxu0 %v396
        %426 = vmatpush.msra.mxu0 %v395
        %427 = vmatpush.msra.mxu0 %v394
        %428 = vmatpush.msra.mxu0 %v393
        %429 = vmatpush.msra.mxu0 %v392
        %430 = vmatpush.msra.mxu0 %v391
        %431 = vmatpush.msra.mxu0 %v390
        %432 = vmatpush.msra.mxu0 %v389
        %433 = vmatpush.msra.mxu0 %v388
        %434 = vmatpush.msra.mxu0 %v387
        %435 = vmatpush.msra.mxu0 %v386
        %436 = vmatpush.msra.mxu0 %v385
        %437 = vmatpush.msra.mxu0 %v384
        %438 = vmatpush.msra.mxu0 %v383
        %439 = vmatmul.f32.gmra.mxu0 %v366
        %v440 = vpop.f32.mrf.mxu0
        %v441 = vadd.f32 %v421, %v440
        %442 = vdwg.mxu0
        %v443 = vadd.f32 %v220, %v441
        %444 = vst.msk [vmem:[%s215] sm:$0xff] %vm235, %v443
        %s445 = sand.u32 %s137, 1
        %s446 = scalar_lea.sflag [#allocation3], %s445
        %s447 = sand.u32 %s137, 1
        %s448 = smul.addr %s447, 8
        %s449 = scalar_lea.vmem [#allocation2], %s448
        // Predicated region
        $region41: #{_recon_forward_impl.1} parent=39 // pred_check
          %p450 = pneg %p147
        $region42: #{_recon_forward_impl.1} parent=39 // pred_check_branch
          %452 = sbr.rel (%p450) target = $region44
        $region43: #{_recon_forward_impl.1} parent=39 // pred_region
          %454 = vsyncadd %s446, 0
          %s455 = smul.addr %s19, 8
          %s456 = scalar_lea.hbm %s5, %s455
          %s458 = sshll.u32 %s449, 4
          %s459 = int_to_ptr.vmem [resolvable:$true] %s458
          %s460 = sshll.u32 %s456, 4
          %s461 = int_to_ptr.hbm [resolvable:$true] %s460
          %463 = dma.vmem_to_hbm [thread:$0]  %s459, 128, %s461, %s446
        $region44: #{_recon_forward_impl.1} parent=39 // pred_fallthru
          _
      $region40: #{_recon_forward_impl.1} parent=5 // pred_fallthru
        _
      %p464 = scmp.le.s32.totalorder 2, %s14
      // Predicated region
      $region45: #{_recon_forward_impl.1} parent=5 // pred_check
        %p465 = pneg %p464
      $region46: #{_recon_forward_impl.1} parent=5 // pred_check_branch
        %467 = sbr.rel (%p465) target = $region48
      $region47: #{_recon_forward_impl.1} parent=5 // pred_region
        %s468 = ssub.s32 %s14, 2
        // Predicated region
        $region49: #{_recon_forward_impl.1} parent=47 // pred_check
          %p469 = pneg %p153
        $region50: #{_recon_forward_impl.1} parent=47 // pred_check_branch
          %471 = sbr.rel (%p469) target = $region52
        $region51: #{_recon_forward_impl.1} parent=47 // pred_region
          %s472 = sand.u32 %s138, 1
          %s473 = scalar_lea.sflag [#allocation3], %s472
          %s474 = sand.u32 %s138, 1
          %s475 = smul.addr %s474, 8
          %s476 = scalar_lea.vmem [#allocation2], %s475
          %478 = dma.done %s473, 128
        $region52: #{_recon_forward_impl.1} parent=47 // pred_fallthru
          _
      $region48: #{_recon_forward_impl.1} parent=5 // pred_fallthru
        _
    $region6: #{_recon_forward_impl.1} parent=1 // loop_footer
      %s18 = sadd.s32 1, %s14
    $region7: #{_recon_forward_impl.1} parent=1 // loop_footer_branch
      %13 = sbr.rel target = $region3
    $region8: #{_recon_forward_impl.1} parent=1 // loop_exit
      _
    %479 = vsyncpa [#allocation3], 1
    %s480 = scalar_lea.sflag [#allocation3], 1
    %481 = vsyncpa %s480, 1

</llo_original>
